<compile_context>
chip_gen: v6e
topology: v6e:2x2x1
jax: 0.10.0
libtpu: 0.0.40
codegen_flags: <defaults>
</compile_context>

<pallas_src>
import functools
import inspect

import jax
import jax.numpy as jnp
from jax.experimental import pallas as pl
from jax.experimental.pallas import tpu as pltpu


LN_EPS = 1e-5  # PyTorch nn.LayerNorm default


def _round_up(n, m):
    return ((n + m - 1) // m) * m


def _vmem_capacity_bytes():
    """Physical VMEM of the local TPU generation (fallback: v7x's 64 MiB)."""
    if hasattr(pltpu, "get_tpu_info"):
        try:  # sizing heuristic only; a failed query must not kill the call
            cap = getattr(pltpu.get_tpu_info(), "vmem_capacity_bytes", None)
            if cap:
                return int(cap)
        except Exception:  # pragma: no cover - off-TPU / old runtime
            pass
    return 64 << 20


def _supports_pipeline_mode():
    """Explicit feature check for BlockSpec(pipeline_mode=pl.Buffered(1))."""
    if not hasattr(pl, "Buffered"):
        return False
    try:
        sig = inspect.signature(pl.BlockSpec)
    except (TypeError, ValueError):
        return False
    return "pipeline_mode" in sig.parameters


_FORI_HAS_UNROLL = "unroll" in inspect.signature(jax.lax.fori_loop).parameters


def _layernorm(h, gamma, beta, inv_h, padded):
    """LayerNorm over the real hidden size; padded columns of h are zero."""
    mean = jnp.sum(h, axis=-1, keepdims=True) * inv_h
    xc = h - mean
    if padded:
        # Padded cols are exactly 0, so sum(h*h) over Hp == over H.  One-pass
        # variance avoids the extra mask multiply / subtraction pass.
        var = jnp.maximum(
            jnp.sum(h * h, axis=-1, keepdims=True) * inv_h - mean * mean, 0.0)
    else:
        var = jnp.sum(xc * xc, axis=-1, keepdims=True) * inv_h
    return xc * jax.lax.rsqrt(var + LN_EPS) * gamma + beta


def res_dnn_resident_kernel(x_ref, w_ref, b_ref, g_ref, bt_ref, gf_ref, bf_ref,
                            o_ref, *, num_dnn, h_real, unroll, fori_unroll):
    # x_ref: (T, Hp); w_ref: (L, Hp, Hp) matmul dtype; b/g/bt: (L, 1, Hp) f32
    # gf/bf: (1, Hp) f32; o_ref: (T, Hp)
    _, Hp = x_ref.shape
    inv_h = jnp.float32(1.0 / h_real)
    padded = h_real != Hp

    def layer(l, h):
        w = w_ref[l]                                        # (Hp, Hp)
        y = jnp.dot(h.astype(w.dtype), w,
                    preferred_element_type=jnp.float32)     # MXU, f32 acc
        y = y + b_ref[l]
        y = _layernorm(y, g_ref[l], bt_ref[l], inv_h, padded)
        return jnp.tanh(y)                                  # dropout: identity

    x = x_ref[...].astype(jnp.float32)
    if unroll:
        h = x
        for l in range(num_dnn):                            # static unroll
            h = layer(l, h)
    elif fori_unroll:
        # unroll=2 gives the scheduler cross-layer visibility (next layer's
        # weight reads overlap this layer's LN/tanh) while bounding live ranges
        h = jax.lax.fori_loop(0, num_dnn, layer, x, unroll=2)
    else:
        h = jax.lax.fori_loop(0, num_dnn, layer, x)

    h = x + h                                               # residual shortcut
    h = _layernorm(h, gf_ref[...], bf_ref[...], inv_h, padded)
    o_ref[...] = jnp.tanh(h).astype(o_ref.dtype)            # dropout: identity


def res_dnn_stream_kernel(x_ref, w_hbm, b_ref, g_ref, bt_ref, gf_ref, bf_ref,
                          o_ref, wbuf, sem, *, num_dnn, h_real):
    # Weights stay in HBM (pl.ANY); one (Hp, Hp) layer slab is double-buffered
    # into wbuf per layer (v7x-friendly: only 2*Hp^2 weight bytes in VMEM).
    _, Hp = x_ref.shape
    inv_h = jnp.float32(1.0 / h_real)
    padded = h_real != Hp

    def fetch(l, slot):
        pltpu.make_async_copy(w_hbm.at[l], wbuf.at[slot], sem.at[slot]).start()

    def wait(slot):
        pltpu.make_async_copy(w_hbm.at[0], wbuf.at[slot], sem.at[slot]).wait()

    fetch(0, 0)
    x = x_ref[...].astype(jnp.float32)
    h = x
    for l in range(num_dnn):                 # L is static at trace time
        slot = l & 1
        wait(slot)
        if l + 1 < num_dnn:
            fetch(l + 1, 1 - slot)           # prefetch next layer's weights
        w = wbuf[slot]
        y = jnp.dot(h.astype(w.dtype), w, preferred_element_type=jnp.float32)
        y = y + b_ref[l]
        y = _layernorm(y, g_ref[l], bt_ref[l], inv_h, padded)
        h = jnp.tanh(y)

    h = x + h
    h = _layernorm(h, gf_ref[...], bf_ref[...], inv_h, padded)
    o_ref[...] = jnp.tanh(h).astype(o_ref.dtype)


def prepare_params(params, *, matmul_dtype=jnp.bfloat16):
    """One-time (hoisted) weight prep: transpose, zero-pad, cast."""
    f32 = jnp.float32
    L, H = params["w"].shape[0], params["w"].shape[-1]
    Hp = _round_up(H, 128)
    ph = Hp - H

    # torch Linear weight (out,in) -> (in,out) so the kernel does h @ w.
    w_t = jnp.transpose(params["w"], (0, 2, 1)).astype(matmul_dtype)
    w_p = jax.lax.pad(w_t, jnp.zeros((), matmul_dtype),
                      ((0, 0, 0), (0, ph, 0), (0, ph, 0)))

    def pad_per_layer(v):
        v = v.astype(f32).reshape(L, 1, H)
        return jax.lax.pad(v, jnp.zeros((), f32),
                           ((0, 0, 0), (0, 0, 0), (0, ph, 0)))

    def pad_vec(v):
        v = v.astype(f32).reshape(1, H)
        return jax.lax.pad(v, jnp.zeros((), f32), ((0, 0, 0), (0, ph, 0)))

    # TODO(synk): on v7x, optionally store weights as fp8 with per-channel
    # scales applied after the f32-accumulated matmul (halves weight VMEM).
    return {
        "w": w_p,
        "b": pad_per_layer(params["b"]),
        "ln_g": pad_per_layer(params["ln_g"]),
        "ln_b": pad_per_layer(params["ln_b"]),
        "final_ln_g": pad_vec(params["final_ln_g"]),
        "final_ln_b": pad_vec(params["final_ln_b"]),
        "H": H, "Hp": Hp, "L": L, "matmul_dtype": matmul_dtype,
    }


def res_dnn_layer(x, params=None, *, prepared=None, row_tile=None,
                  matmul_dtype=jnp.bfloat16, weight_mode="auto",
                  unroll_layer_limit=4):
    """x: (N, H) flattened activations.

    params: raw stacked parameters, or pass `prepared=prepare_params(...)`
    (recommended for repeated inference: the transpose/pad/cast is hoisted).
    weight_mode: "auto" | "resident" | "stream".
    """
    assert params is not None or prepared is not None
    if prepared is None:
        prepared = prepare_params(params, matmul_dtype=matmul_dtype)

    N, H = x.shape
    Hp, L = prepared["Hp"], prepared["L"]
    assert prepared["H"] == H
    mm_dtype = prepared["matmul_dtype"]
    x_isz = jnp.dtype(x.dtype).itemsize
    w_isz = jnp.dtype(mm_dtype).itemsize

    # ---- generation-aware VMEM budgeting --------------------------------
    vmem_cap = _vmem_capacity_bytes()          # 128 MiB v5e/v6e, 64 MiB v7x
    cap_budget = int(vmem_cap * 0.9)

    supports_buffered = _supports_pipeline_mode()
    nbuf_inv = 1 if supports_buffered else 2   # grid-invariant operand buffers

    w_bytes = L * Hp * Hp * w_isz
    small_bytes = nbuf_inv * (3 * L + 2) * Hp * 4

    def sized(tile, streaming):
        io = 2 * 2 * tile * Hp * x_isz          # x + out, double-buffered
        work = 4 * tile * Hp * 4                # in-kernel f32 working set
        wgt = (2 * Hp * Hp * w_isz) if streaming else (nbuf_inv * w_bytes)
        return wgt + small_bytes + io + work

    if weight_mode == "auto":
        # Stream weights when the resident stack can't fit even with a small
        # row tile (v7x at large H; v5e/v6e keep weights resident).
        streaming = sized(128, False) > cap_budget
    else:
        streaming = (weight_mode == "stream")

    # ---- row-tile selection (big tiles amortize ~0.35us/step overhead) ---
    cand_list = [row_tile] if row_tile is not None else [1024, 512, 256, 128, 64]
    chosen = cand_list[-1]
    for cand in cand_list:
        if sized(cand, streaming) <= cap_budget:
            chosen = cand
            break
    tile = _round_up(max(8, min(chosen, _round_up(N, 8))), 8)
    # v7x megacore: keep >= 2 grid steps so "parallel" can use both TCs.
    if N > 8 and pl.cdiv(N, tile) < 2:
        tile = _round_up(pl.cdiv(N, 2), 8)
    Np = _round_up(N, tile)
    grid = (Np // tile,)

    vmem_limit = min(max(int(sized(tile, streaming) * 1.2), 32 << 20), cap_budget)

    # ---- pad inputs only when needed -------------------------------------
    if Np == N and Hp == H:
        x_p = x
    else:
        x_p = jax.lax.pad(x, jnp.zeros((), x.dtype),
                          ((0, Np - N, 0), (0, Hp - H, 0)))

    # ---- specs ------------------------------------------------------------
    full3 = lambda i: (0, 0, 0)
    full2 = lambda i: (0, 0)
    inv_kw = {"pipeline_mode": pl.Buffered(1)} if supports_buffered else {}

    small_specs = [
        pl.BlockSpec((L, 1, Hp), full3, **inv_kw),   # per-layer bias
        pl.BlockSpec((L, 1, Hp), full3, **inv_kw),   # per-layer LN gamma
        pl.BlockSpec((L, 1, Hp), full3, **inv_kw),   # per-layer LN beta
        pl.BlockSpec((1, Hp), full2, **inv_kw),      # final LN gamma
        pl.BlockSpec((1, Hp), full2, **inv_kw),      # final LN beta
    ]
    io_spec = pl.BlockSpec((tile, Hp), lambda i: (i, 0))

    if streaming:
        kernel = functools.partial(res_dnn_stream_kernel, num_dnn=L, h_real=H)
        w_spec = pl.BlockSpec(memory_space=pl.ANY)   # weights stay in HBM
        scratch = [pltpu.VMEM((2, Hp, Hp), mm_dtype),
                   pltpu.SemaphoreType.DMA((2,))]
    else:
        kernel = functools.partial(
            res_dnn_resident_kernel, num_dnn=L, h_real=H,
            unroll=(L <= unroll_layer_limit), fori_unroll=_FORI_HAS_UNROLL)
        w_spec = pl.BlockSpec((L, Hp, Hp), full3, **inv_kw)
        scratch = []

    # TODO(synk): if downstream accepts bf16 activations, make out_shape /
    # x bf16 to halve the pipelined HBM IO bytes.
    out = pl.pallas_call(
        kernel,
        out_shape=jax.ShapeDtypeStruct((Np, Hp), x.dtype),
        grid_spec=pltpu.PrefetchScalarGridSpec(
            num_scalar_prefetch=0,
            grid=grid,
            in_specs=[io_spec, w_spec] + small_specs,
            out_specs=io_spec,
            scratch_shapes=scratch),
        compiler_params=pltpu.CompilerParams(
            dimension_semantics=("parallel",),
            vmem_limit_bytes=vmem_limit),
    )(x_p, prepared["w"], prepared["b"], prepared["ln_g"], prepared["ln_b"],
      prepared["final_ln_g"], prepared["final_ln_b"])

    if Np == N and Hp == H:
        return out
    return out[:N, :H]


def make_params(key, hidden_size, num_dnn):
    kw, kb = jax.random.split(key)
    w = 0.1 * jax.random.normal(kw, (num_dnn, hidden_size, hidden_size),
                                dtype=jnp.float32)   # (L, out, in) torch-style
    b = 0.1 * jax.random.normal(kb, (num_dnn, hidden_size), dtype=jnp.float32)
    return {
        "w": w,
        "b": b,
        "ln_g": jnp.ones((num_dnn, hidden_size), jnp.float32),
        "ln_b": jnp.zeros((num_dnn, hidden_size), jnp.float32),
        "final_ln_g": jnp.ones((hidden_size,), jnp.float32),
        "final_ln_b": jnp.zeros((hidden_size,), jnp.float32),
    }


def reference(x, params):
    # Pure-JAX reference replicating the PyTorch forward (eval mode).
    L = params["w"].shape[0]
    h = x.astype(jnp.float32)
    x0 = h
    for l in range(L):
        h = h @ params["w"][l].T + params["b"][l]
        mean = jnp.mean(h, axis=-1, keepdims=True)
        var = jnp.mean((h - mean) ** 2, axis=-1, keepdims=True)
        h = (h - mean) / jnp.sqrt(var + LN_EPS)
        h = h * params["ln_g"][l] + params["ln_b"][l]
        h = jnp.tanh(h)
    h = x0 + h
    mean = jnp.mean(h, axis=-1, keepdims=True)
    var = jnp.mean((h - mean) ** 2, axis=-1, keepdims=True)
    h = (h - mean) / jnp.sqrt(var + LN_EPS)
    h = h * params["final_ln_g"] + params["final_ln_b"]
    return jnp.tanh(h)


if __name__ == "__main__":
    batch, seq, hidden = 2, 8, 32
    num_dnn = 2

    key = jax.random.PRNGKey(0)
    kx, kp = jax.random.split(key)
    x = jax.random.normal(kx, (batch, seq, hidden), dtype=jnp.float32)
    params = make_params(kp, hidden, num_dnn)

    x2d = x.reshape(batch * seq, hidden)          # glue: flatten (B, S, H)
    ref = reference(x2d, params)

    # Hoisted (one-time) weight prep — reused across calls.
    prep_f32 = prepare_params(params, matmul_dtype=jnp.float32)
    prep_bf16 = prepare_params(params, matmul_dtype=jnp.bfloat16)

    # 1) Resident weights, f32 matmul: tight check vs the PyTorch-equivalent ref.
    out_f32 = jax.block_until_ready(
        res_dnn_layer(x2d, prepared=prep_f32, weight_mode="resident"))
    assert out_f32.shape == (batch * seq, hidden)
    err32 = jnp.max(jnp.abs(out_f32 - ref))
    assert jnp.allclose(out_f32, ref, atol=1e-4, rtol=1e-4), \
        f"resident f32 max abs err {err32}"

    # 2) Resident weights, bf16 MXU inputs with f32 accumulation (fast path).
    out_bf16 = jax.block_until_ready(
        res_dnn_layer(x2d, prepared=prep_bf16, weight_mode="resident"))
    errbf = jnp.max(jnp.abs(out_bf16 - ref))
    assert jnp.allclose(out_bf16, ref, atol=3e-2, rtol=0.0), \
        f"resident bf16 max abs err {errbf}"

    # 3) Streamed weights (v7x big-weight path), bf16: validates the manual
    #    double-buffered DMA pipeline end-to-end.
    out_stream = jax.block_until_ready(
        res_dnn_layer(x2d, prepared=prep_bf16, weight_mode="stream"))
    errst = jnp.max(jnp.abs(out_stream - ref))
    assert jnp.allclose(out_stream, ref, atol=3e-2, rtol=0.0), \
        f"streamed bf16 max abs err {errst}"

    out = out_bf16.reshape(batch, seq, hidden)
    assert out.shape == (batch, seq, hidden)

    print("KERNEL_OK")
</pallas_src>

<mosaic_0001>
module attributes {stable_mosaic.version = 11 : i64} {
  func.func @res_dnn_resident_kernel(%arg0: i32, %arg1: memref<8x128xf32, #tpu.memory_space<vmem>>, %arg2: memref<2x128x128xf32, #tpu.memory_space<vmem>>, %arg3: memref<2x1x128xf32, #tpu.memory_space<vmem>>, %arg4: memref<2x1x128xf32, #tpu.memory_space<vmem>>, %arg5: memref<2x1x128xf32, #tpu.memory_space<vmem>>, %arg6: memref<1x128xf32, #tpu.memory_space<vmem>>, %arg7: memref<1x128xf32, #tpu.memory_space<vmem>>, %arg8: memref<8x128xf32, #tpu.memory_space<vmem>>) attributes {dimension_semantics = [#tpu.dimension_semantics<parallel>], iteration_bounds = array<i64: 2>, scalar_prefetch = 0 : i64, scratch_operands = 0 : i64, tpu.core_type = #tpu.core_type<tc>, window_params = [{transform_indices = @transform_0, window_bounds = array<i64: 8, 128>}, {pipeline_mode = #tpu.pipeline_mode<synchronous>, transform_indices = @transform_1, window_bounds = array<i64: 2, 128, 128>}, {pipeline_mode = #tpu.pipeline_mode<synchronous>, transform_indices = @transform_2, window_bounds = array<i64: 2, 1, 128>}, {pipeline_mode = #tpu.pipeline_mode<synchronous>, transform_indices = @transform_3, window_bounds = array<i64: 2, 1, 128>}, {pipeline_mode = #tpu.pipeline_mode<synchronous>, transform_indices = @transform_4, window_bounds = array<i64: 2, 1, 128>}, {pipeline_mode = #tpu.pipeline_mode<synchronous>, transform_indices = @transform_5, window_bounds = array<i64: 1, 128>}, {pipeline_mode = #tpu.pipeline_mode<synchronous>, transform_indices = @transform_6, window_bounds = array<i64: 1, 128>}, {transform_indices = @transform_7, window_bounds = array<i64: 8, 128>}]} {
    %c0 = arith.constant 0 : index
    %c0_0 = arith.constant 0 : index
    %0 = vector.load %arg1[%c0, %c0_0] : memref<8x128xf32, #tpu.memory_space<vmem>>, vector<8x128xf32>
    %c0_1 = arith.constant 0 : index
    %c0_2 = arith.constant 0 : index
    %c0_3 = arith.constant 0 : index
    %1 = vector.load %arg2[%c0_1, %c0_2, %c0_3] : memref<2x128x128xf32, #tpu.memory_space<vmem>>, vector<1x128x128xf32>
    %2 = vector.shape_cast %1 : vector<1x128x128xf32> to vector<128x128xf32>
    %cst = arith.constant dense<0.000000e+00> : vector<8x128xf32>
    %3 = tpu.matmul %0, %2, %cst {dimension_numbers = #tpu.dot_dimension_numbers<[1], [0], [0], [1], [0, 0, 1, 1], [], []>} : vector<8x128xf32>, vector<128x128xf32>, vector<8x128xf32> -> vector<8x128xf32>
    %c0_4 = arith.constant 0 : index
    %c0_5 = arith.constant 0 : index
    %c0_6 = arith.constant 0 : index
    %4 = vector.load %arg3[%c0_4, %c0_5, %c0_6] : memref<2x1x128xf32, #tpu.memory_space<vmem>>, vector<1x1x128xf32>
    %5 = vector.shape_cast %4 : vector<1x1x128xf32> to vector<1x128xf32>
    %6 = vector.broadcast %5 : vector<1x128xf32> to vector<8x128xf32>
    %7 = arith.addf %3, %6 : vector<8x128xf32>
    %c0_7 = arith.constant 0 : index
    %c0_8 = arith.constant 0 : index
    %c0_9 = arith.constant 0 : index
    %8 = vector.load %arg4[%c0_7, %c0_8, %c0_9] : memref<2x1x128xf32, #tpu.memory_space<vmem>>, vector<1x1x128xf32>
    %9 = vector.shape_cast %8 : vector<1x1x128xf32> to vector<1x128xf32>
    %c0_10 = arith.constant 0 : index
    %c0_11 = arith.constant 0 : index
    %c0_12 = arith.constant 0 : index
    %10 = vector.load %arg5[%c0_10, %c0_11, %c0_12] : memref<2x1x128xf32, #tpu.memory_space<vmem>>, vector<1x1x128xf32>
    %11 = vector.shape_cast %10 : vector<1x1x128xf32> to vector<1x128xf32>
    %cst_13 = arith.constant dense<0.000000e+00> : vector<8xf32>
    %12 = vector.multi_reduction <add>, %7, %cst_13 [1] : vector<8x128xf32> to vector<8xf32>
    %13 = vector.shape_cast %12 : vector<8xf32> to vector<8x1xf32>
    %cst_14 = arith.constant 3.125000e-02 : f32
    %14 = vector.broadcast %cst_14 : f32 to vector<8x1xf32>
    %15 = arith.mulf %13, %14 : vector<8x1xf32>
    %16 = vector.broadcast %15 : vector<8x1xf32> to vector<8x128xf32>
    %17 = arith.subf %7, %16 : vector<8x128xf32>
    %18 = arith.mulf %7, %7 : vector<8x128xf32>
    %cst_15 = arith.constant dense<0.000000e+00> : vector<8xf32>
    %19 = vector.multi_reduction <add>, %18, %cst_15 [1] : vector<8x128xf32> to vector<8xf32>
    %20 = vector.shape_cast %19 : vector<8xf32> to vector<8x1xf32>
    %cst_16 = arith.constant 3.125000e-02 : f32
    %21 = vector.broadcast %cst_16 : f32 to vector<8x1xf32>
    %22 = arith.mulf %20, %21 : vector<8x1xf32>
    %23 = arith.mulf %15, %15 : vector<8x1xf32>
    %24 = arith.subf %22, %23 : vector<8x1xf32>
    %cst_17 = arith.constant 0.000000e+00 : f32
    %25 = vector.broadcast %cst_17 : f32 to vector<8x1xf32>
    %26 = arith.maximumf %24, %25 : vector<8x1xf32>
    %cst_18 = arith.constant 9.99999974E-6 : f32
    %27 = vector.broadcast %cst_18 : f32 to vector<8x1xf32>
    %28 = arith.addf %26, %27 : vector<8x1xf32>
    %29 = math.rsqrt %28 : vector<8x1xf32>
    %30 = vector.broadcast %29 : vector<8x1xf32> to vector<8x128xf32>
    %31 = arith.mulf %17, %30 : vector<8x128xf32>
    %32 = vector.broadcast %9 : vector<1x128xf32> to vector<8x128xf32>
    %33 = arith.mulf %31, %32 : vector<8x128xf32>
    %34 = vector.broadcast %11 : vector<1x128xf32> to vector<8x128xf32>
    %35 = arith.addf %33, %34 : vector<8x128xf32>
    %36 = math.tanh %35 : vector<8x128xf32>
    %c1 = arith.constant 1 : index
    %c0_19 = arith.constant 0 : index
    %c0_20 = arith.constant 0 : index
    %37 = vector.load %arg2[%c1, %c0_19, %c0_20] : memref<2x128x128xf32, #tpu.memory_space<vmem>>, vector<1x128x128xf32>
    %38 = vector.shape_cast %37 : vector<1x128x128xf32> to vector<128x128xf32>
    %cst_21 = arith.constant dense<0.000000e+00> : vector<8x128xf32>
    %39 = tpu.matmul %36, %38, %cst_21 {dimension_numbers = #tpu.dot_dimension_numbers<[1], [0], [0], [1], [0, 0, 1, 1], [], []>} : vector<8x128xf32>, vector<128x128xf32>, vector<8x128xf32> -> vector<8x128xf32>
    %c1_22 = arith.constant 1 : index
    %c0_23 = arith.constant 0 : index
    %c0_24 = arith.constant 0 : index
    %40 = vector.load %arg3[%c1_22, %c0_23, %c0_24] : memref<2x1x128xf32, #tpu.memory_space<vmem>>, vector<1x1x128xf32>
    %41 = vector.shape_cast %40 : vector<1x1x128xf32> to vector<1x128xf32>
    %42 = vector.broadcast %41 : vector<1x128xf32> to vector<8x128xf32>
    %43 = arith.addf %39, %42 : vector<8x128xf32>
    %c1_25 = arith.constant 1 : index
    %c0_26 = arith.constant 0 : index
    %c0_27 = arith.constant 0 : index
    %44 = vector.load %arg4[%c1_25, %c0_26, %c0_27] : memref<2x1x128xf32, #tpu.memory_space<vmem>>, vector<1x1x128xf32>
    %45 = vector.shape_cast %44 : vector<1x1x128xf32> to vector<1x128xf32>
    %c1_28 = arith.constant 1 : index
    %c0_29 = arith.constant 0 : index
    %c0_30 = arith.constant 0 : index
    %46 = vector.load %arg5[%c1_28, %c0_29, %c0_30] : memref<2x1x128xf32, #tpu.memory_space<vmem>>, vector<1x1x128xf32>
    %47 = vector.shape_cast %46 : vector<1x1x128xf32> to vector<1x128xf32>
    %cst_31 = arith.constant dense<0.000000e+00> : vector<8xf32>
    %48 = vector.multi_reduction <add>, %43, %cst_31 [1] : vector<8x128xf32> to vector<8xf32>
    %49 = vector.shape_cast %48 : vector<8xf32> to vector<8x1xf32>
    %cst_32 = arith.constant 3.125000e-02 : f32
    %50 = vector.broadcast %cst_32 : f32 to vector<8x1xf32>
    %51 = arith.mulf %49, %50 : vector<8x1xf32>
    %52 = vector.broadcast %51 : vector<8x1xf32> to vector<8x128xf32>
    %53 = arith.subf %43, %52 : vector<8x128xf32>
    %54 = arith.mulf %43, %43 : vector<8x128xf32>
    %cst_33 = arith.constant dense<0.000000e+00> : vector<8xf32>
    %55 = vector.multi_reduction <add>, %54, %cst_33 [1] : vector<8x128xf32> to vector<8xf32>
    %56 = vector.shape_cast %55 : vector<8xf32> to vector<8x1xf32>
    %cst_34 = arith.constant 3.125000e-02 : f32
    %57 = vector.broadcast %cst_34 : f32 to vector<8x1xf32>
    %58 = arith.mulf %56, %57 : vector<8x1xf32>
    %59 = arith.mulf %51, %51 : vector<8x1xf32>
    %60 = arith.subf %58, %59 : vector<8x1xf32>
    %cst_35 = arith.constant 0.000000e+00 : f32
    %61 = vector.broadcast %cst_35 : f32 to vector<8x1xf32>
    %62 = arith.maximumf %60, %61 : vector<8x1xf32>
    %cst_36 = arith.constant 9.99999974E-6 : f32
    %63 = vector.broadcast %cst_36 : f32 to vector<8x1xf32>
    %64 = arith.addf %62, %63 : vector<8x1xf32>
    %65 = math.rsqrt %64 : vector<8x1xf32>
    %66 = vector.broadcast %65 : vector<8x1xf32> to vector<8x128xf32>
    %67 = arith.mulf %53, %66 : vector<8x128xf32>
    %68 = vector.broadcast %45 : vector<1x128xf32> to vector<8x128xf32>
    %69 = arith.mulf %67, %68 : vector<8x128xf32>
    %70 = vector.broadcast %47 : vector<1x128xf32> to vector<8x128xf32>
    %71 = arith.addf %69, %70 : vector<8x128xf32>
    %72 = math.tanh %71 : vector<8x128xf32>
    %73 = arith.addf %0, %72 : vector<8x128xf32>
    %c0_37 = arith.constant 0 : index
    %c0_38 = arith.constant 0 : index
    %74 = vector.load %arg6[%c0_37, %c0_38] : memref<1x128xf32, #tpu.memory_space<vmem>>, vector<1x128xf32>
    %c0_39 = arith.constant 0 : index
    %c0_40 = arith.constant 0 : index
    %75 = vector.load %arg7[%c0_39, %c0_40] : memref<1x128xf32, #tpu.memory_space<vmem>>, vector<1x128xf32>
    %cst_41 = arith.constant dense<0.000000e+00> : vector<8xf32>
    %76 = vector.multi_reduction <add>, %73, %cst_41 [1] : vector<8x128xf32> to vector<8xf32>
    %77 = vector.shape_cast %76 : vector<8xf32> to vector<8x1xf32>
    %cst_42 = arith.constant 3.125000e-02 : f32
    %78 = vector.broadcast %cst_42 : f32 to vector<8x1xf32>
    %79 = arith.mulf %77, %78 : vector<8x1xf32>
    %80 = vector.broadcast %79 : vector<8x1xf32> to vector<8x128xf32>
    %81 = arith.subf %73, %80 : vector<8x128xf32>
    %82 = arith.mulf %73, %73 : vector<8x128xf32>
    %cst_43 = arith.constant dense<0.000000e+00> : vector<8xf32>
    %83 = vector.multi_reduction <add>, %82, %cst_43 [1] : vector<8x128xf32> to vector<8xf32>
    %84 = vector.shape_cast %83 : vector<8xf32> to vector<8x1xf32>
    %cst_44 = arith.constant 3.125000e-02 : f32
    %85 = vector.broadcast %cst_44 : f32 to vector<8x1xf32>
    %86 = arith.mulf %84, %85 : vector<8x1xf32>
    %87 = arith.mulf %79, %79 : vector<8x1xf32>
    %88 = arith.subf %86, %87 : vector<8x1xf32>
    %cst_45 = arith.constant 0.000000e+00 : f32
    %89 = vector.broadcast %cst_45 : f32 to vector<8x1xf32>
    %90 = arith.maximumf %88, %89 : vector<8x1xf32>
    %cst_46 = arith.constant 9.99999974E-6 : f32
    %91 = vector.broadcast %cst_46 : f32 to vector<8x1xf32>
    %92 = arith.addf %90, %91 : vector<8x1xf32>
    %93 = math.rsqrt %92 : vector<8x1xf32>
    %94 = vector.broadcast %93 : vector<8x1xf32> to vector<8x128xf32>
    %95 = arith.mulf %81, %94 : vector<8x128xf32>
    %96 = vector.broadcast %74 : vector<1x128xf32> to vector<8x128xf32>
    %97 = arith.mulf %95, %96 : vector<8x128xf32>
    %98 = vector.broadcast %75 : vector<1x128xf32> to vector<8x128xf32>
    %99 = arith.addf %97, %98 : vector<8x128xf32>
    %100 = math.tanh %99 : vector<8x128xf32>
    %c0_47 = arith.constant 0 : index
    %c0_48 = arith.constant 0 : index
    %101 = vector.load %arg8[%c0_47, %c0_48] : memref<8x128xf32, #tpu.memory_space<vmem>>, vector<8x128xf32>
    tpu.vector_store %arg8[%c0_47, %c0_48], %100 {strides = array<i32>} : memref<8x128xf32, #tpu.memory_space<vmem>>, vector<8x128xf32>,
    return
  }
  func.func @transform_0(%arg0: i32) -> (i32, i32) {
    %c0_i32 = arith.constant 0 : i32
    %c0_i32_0 = arith.constant 0 : i32
    return %arg0, %c0_i32 : i32, i32
  }
  func.func @transform_1(%arg0: i32) -> (i32, i32, i32) {
    %c0_i32 = arith.constant 0 : i32
    %c0_i32_0 = arith.constant 0 : i32
    %c0_i32_1 = arith.constant 0 : i32
    %c0_i32_2 = arith.constant 0 : i32
    return %c0_i32, %c0_i32_0, %c0_i32_1 : i32, i32, i32
  }
  func.func @transform_2(%arg0: i32) -> (i32, i32, i32) {
    %c0_i32 = arith.constant 0 : i32
    %c0_i32_0 = arith.constant 0 : i32
    %c0_i32_1 = arith.constant 0 : i32
    %c0_i32_2 = arith.constant 0 : i32
    return %c0_i32, %c0_i32_0, %c0_i32_1 : i32, i32, i32
  }
  func.func @transform_3(%arg0: i32) -> (i32, i32, i32) {
    %c0_i32 = arith.constant 0 : i32
    %c0_i32_0 = arith.constant 0 : i32
    %c0_i32_1 = arith.constant 0 : i32
    %c0_i32_2 = arith.constant 0 : i32
    return %c0_i32, %c0_i32_0, %c0_i32_1 : i32, i32, i32
  }
  func.func @transform_4(%arg0: i32) -> (i32, i32, i32) {
    %c0_i32 = arith.constant 0 : i32
    %c0_i32_0 = arith.constant 0 : i32
    %c0_i32_1 = arith.constant 0 : i32
    %c0_i32_2 = arith.constant 0 : i32
    return %c0_i32, %c0_i32_0, %c0_i32_1 : i32, i32, i32
  }
  func.func @transform_5(%arg0: i32) -> (i32, i32) {
    %c0_i32 = arith.constant 0 : i32
    %c0_i32_0 = arith.constant 0 : i32
    %c0_i32_1 = arith.constant 0 : i32
    return %c0_i32, %c0_i32_0 : i32, i32
  }
  func.func @transform_6(%arg0: i32) -> (i32, i32) {
    %c0_i32 = arith.constant 0 : i32
    %c0_i32_0 = arith.constant 0 : i32
    %c0_i32_1 = arith.constant 0 : i32
    return %c0_i32, %c0_i32_0 : i32, i32
  }
  func.func @transform_7(%arg0: i32) -> (i32, i32) {
    %c0_i32 = arith.constant 0 : i32
    %c0_i32_0 = arith.constant 0 : i32
    return %arg0, %c0_i32 : i32, i32
  }
}

</mosaic_0001>

<llo_original>
// kernel: tpu_custom_call.1
$region0: #{tpu_custom_call.1}
  #allocation0 [shape = 'u32[]', space=smem, size = 0x4, offset = 0x4, fixed_abs, tag = 'smem constant byte address 0x4 - core index']
  #allocation1 [shape = 'u32[144,128]{1,0:T(1,128)}', space=vmem, size = 0x12000, scoped, tag = 'internal scratch']
  %s0 = inlined_call_operand.hbm [shape: f32[16,128], index: 0, kind: input, shape index: {}]
  %s1 = inlined_call_operand.hbm [shape: f32[2,128,128], index: 1, kind: input, shape index: {}]
  %s2 = inlined_call_operand.vmem [shape: f32[2,1,128], index: 2, kind: input, shape index: {}]
  %s3 = inlined_call_operand.vmem [shape: f32[2,1,128], index: 3, kind: input, shape index: {}]
  %s4 = inlined_call_operand.vmem [shape: f32[2,1,128], index: 4, kind: input, shape index: {}]
  %s5 = inlined_call_operand.vmem [shape: f32[1,128], index: 5, kind: input, shape index: {}]
  %s6 = inlined_call_operand.vmem [shape: f32[1,128], index: 6, kind: input, shape index: {}]
  %s7 = inlined_call_operand.hbm [shape: f32[16,128], index: 7, kind: output, shape index: {}]
  %s8 = sld [smem:[#allocation0]]
  $region69: #{tpu_custom_call.1} parent=0
    _
  %s10 = ssub.s32 1, %s8
  %s11 = scalar_select 0, %s10, %s8
  $region1: #{tpu_custom_call.1} parent=0
    #allocation2 [shape = 'u8[8192]{0}', space=vmem, size = 0x2000, scoped, tag = 'input window, operand 0']
    #allocation3 [shape = 's32[2]{0}', space=sflag, size = 0x8, scoped, tag = 'scoped memory for tpu_custom_call.1']
    #allocation4 [shape = 's32[2]{0}', space=sflag, size = 0x8, scoped, tag = 'scoped memory for tpu_custom_call.1']
    #allocation5 [shape = 'u8[131072]{0}', space=vmem, size = 0x20000, scoped, tag = 'input window, operand 1, single buffered']
    #allocation6 [shape = 's32[1]{0}', space=sflag, size = 0x4, scoped, tag = 'scoped memory for tpu_custom_call.1']
    #allocation7 [shape = 'u8[8192]{0}', space=vmem, size = 0x2000, scoped, tag = 'output window, operand 0']
    %12 = vsyncpa [#allocation3], 0
    %s13 = scalar_lea.sflag [#allocation3], 1
    %14 = vsyncpa %s13, 0
    %15 = vsyncpa [#allocation6], 0
    %16 = vsyncpa [#allocation4], 0
    %s17 = scalar_lea.sflag [#allocation4], 1
    %18 = vsyncpa %s17, 0
    loop: start=0, step=1, limit=4
    $region2: #{tpu_custom_call.1} parent=1 // loop_pre_header
      _
    $region3: #{tpu_custom_call.1} parent=1 // loop_header
      %s20 = sphi 0, %s24
      %p21 = scmp.ge.s32.totalorder %s20, 4
      %s30 = sphi 0, %s32
      %s33 = sphi 0, %s30
      %s34 = sphi 0, %s33
      %s50 = sphi 0, %s34
      %s54 = sphi 0, %s54
      %s56 = sphi 0, %s54
      %s57 = sphi 0, %s56
      %s71 = sphi 0, %s57
      %s75 = sphi 0, %s75
      %s77 = sphi 0, %s75
      %s78 = sphi 0, %s77
      %s92 = sphi 0, %s78
      %s96 = sphi 0, %s96
      %s98 = sphi 0, %s96
      %s99 = sphi 0, %s98
      %s113 = sphi 0, %s99
      %s117 = sphi 0, %s117
      %s119 = sphi 0, %s117
      %s120 = sphi 0, %s119
      %s134 = sphi 0, %s120
      %s138 = sphi 0, %s138
      %s140 = sphi 0, %s138
      %s141 = sphi 0, %s140
      %s155 = sphi 0, %s141
      %s159 = sphi 0, %s159
      %s161 = sphi 0, %s159
      %s162 = sphi 0, %s161
      %s176 = sphi 0, %s162
      %s182 = sphi 0, %s184
      %s185 = sphi 0, %s182
      %s186 = sphi 0, %s185
      %s202 = sphi 0, %s186
    $region4: #{tpu_custom_call.1} parent=1 // loop_header_branch
      %23 = sbr.rel (%p21) target = $region8
    $region5: #{tpu_custom_call.1} parent=1 // loop_body
      %s25 = ssub.s32 %s20, 1
      %s26 = ssub.s32 %s20, 2
      %s27 = sadd.s32 %s20, 1
      %s28 = ssub.s32 %s20, %s27
      %p29 = scmp.eq.s32.totalorder %s28, 0
      %s31 = sadd.s32 %s30, 1
      %s32 = scalar_select %p29, %s30, %s31
      %p35 = pneg %p29
      %p36 = scmp.eq.s32.totalorder %s20, 1
      %p37 = por %p35, %p36
      %p38 = scmp.ne.s32.totalorder %s30, %s33
      %p39 = scmp.eq.s32.totalorder %s20, 0
      %p40 = por %p38, %p39
      %p41 = scmp.ne.s32.totalorder %s30, %s33
      %p42 = scmp.eq.s32.totalorder %s25, 1
      %p43 = por %p41, %p42
      %p44 = scmp.ne.s32.totalorder %s33, %s34
      %p45 = scmp.eq.s32.totalorder %s25, 0
      %p46 = por %p44, %p45
      %p47 = scmp.ne.s32.totalorder %s33, %s34
      %p48 = scmp.eq.s32.totalorder %s26, 1
      %p49 = por %p47, %p48
      %p51 = scmp.ne.s32.totalorder %s34, %s50
      %p52 = scmp.eq.s32.totalorder %s26, 0
      %p53 = por %p51, %p52
      %s55 = sadd.s32 %s54, 1
      %p58 = scmp.eq.s32.totalorder %s20, 1
      %p59 = scmp.ne.s32.totalorder %s54, %s56
      %p60 = scmp.eq.s32.totalorder %s20, 0
      %p61 = por %p59, %p60
      %p62 = scmp.ne.s32.totalorder %s54, %s56
      %p63 = scmp.eq.s32.totalorder %s25, 1
      %p64 = por %p62, %p63
      %p65 = scmp.ne.s32.totalorder %s56, %s57
      %p66 = scmp.eq.s32.totalorder %s25, 0
      %p67 = por %p65, %p66
      %p68 = scmp.ne.s32.totalorder %s56, %s57
      %p69 = scmp.eq.s32.totalorder %s26, 1
      %p70 = por %p68, %p69
      %p72 = scmp.ne.s32.totalorder %s57, %s71
      %p73 = scmp.eq.s32.totalorder %s26, 0
      %p74 = por %p72, %p73
      %s76 = sadd.s32 %s75, 1
      %p79 = scmp.eq.s32.totalorder %s20, 1
      %p80 = scmp.ne.s32.totalorder %s75, %s77
      %p81 = scmp.eq.s32.totalorder %s20, 0
      %p82 = por %p80, %p81
      %p83 = scmp.ne.s32.totalorder %s75, %s77
      %p84 = scmp.eq.s32.totalorder %s25, 1
      %p85 = por %p83, %p84
      %p86 = scmp.ne.s32.totalorder %s77, %s78
      %p87 = scmp.eq.s32.totalorder %s25, 0
      %p88 = por %p86, %p87
      %p89 = scmp.ne.s32.totalorder %s77, %s78
      %p90 = scmp.eq.s32.totalorder %s26, 1
      %p91 = por %p89, %p90
      %p93 = scmp.ne.s32.totalorder %s78, %s92
      %p94 = scmp.eq.s32.totalorder %s26, 0
      %p95 = por %p93, %p94
      %s97 = sadd.s32 %s96, 1
      %p100 = scmp.eq.s32.totalorder %s20, 1
      %p101 = scmp.ne.s32.totalorder %s96, %s98
      %p102 = scmp.eq.s32.totalorder %s20, 0
      %p103 = por %p101, %p102
      %p104 = scmp.ne.s32.totalorder %s96, %s98
      %p105 = scmp.eq.s32.totalorder %s25, 1
      %p106 = por %p104, %p105
      %p107 = scmp.ne.s32.totalorder %s98, %s99
      %p108 = scmp.eq.s32.totalorder %s25, 0
      %p109 = por %p107, %p108
      %p110 = scmp.ne.s32.totalorder %s98, %s99
      %p111 = scmp.eq.s32.totalorder %s26, 1
      %p112 = por %p110, %p111
      %p114 = scmp.ne.s32.totalorder %s99, %s113
      %p115 = scmp.eq.s32.totalorder %s26, 0
      %p116 = por %p114, %p115
      %s118 = sadd.s32 %s117, 1
      %p121 = scmp.eq.s32.totalorder %s20, 1
      %p122 = scmp.ne.s32.totalorder %s117, %s119
      %p123 = scmp.eq.s32.totalorder %s20, 0
      %p124 = por %p122, %p123
      %p125 = scmp.ne.s32.totalorder %s117, %s119
      %p126 = scmp.eq.s32.totalorder %s25, 1
      %p127 = por %p125, %p126
      %p128 = scmp.ne.s32.totalorder %s119, %s120
      %p129 = scmp.eq.s32.totalorder %s25, 0
      %p130 = por %p128, %p129
      %p131 = scmp.ne.s32.totalorder %s119, %s120
      %p132 = scmp.eq.s32.totalorder %s26, 1
      %p133 = por %p131, %p132
      %p135 = scmp.ne.s32.totalorder %s120, %s134
      %p136 = scmp.eq.s32.totalorder %s26, 0
      %p137 = por %p135, %p136
      %s139 = sadd.s32 %s138, 1
      %p142 = scmp.eq.s32.totalorder %s20, 1
      %p143 = scmp.ne.s32.totalorder %s138, %s140
      %p144 = scmp.eq.s32.totalorder %s20, 0
      %p145 = por %p143, %p144
      %p146 = scmp.ne.s32.totalorder %s138, %s140
      %p147 = scmp.eq.s32.totalorder %s25, 1
      %p148 = por %p146, %p147
      %p149 = scmp.ne.s32.totalorder %s140, %s141
      %p150 = scmp.eq.s32.totalorder %s25, 0
      %p151 = por %p149, %p150
      %p152 = scmp.ne.s32.totalorder %s140, %s141
      %p153 = scmp.eq.s32.totalorder %s26, 1
      %p154 = por %p152, %p153
      %p156 = scmp.ne.s32.totalorder %s141, %s155
      %p157 = scmp.eq.s32.totalorder %s26, 0
      %p158 = por %p156, %p157
      %s160 = sadd.s32 %s159, 1
      %p163 = scmp.eq.s32.totalorder %s20, 1
      %p164 = scmp.ne.s32.totalorder %s159, %s161
      %p165 = scmp.eq.s32.totalorder %s20, 0
      %p166 = por %p164, %p165
      %p167 = scmp.ne.s32.totalorder %s159, %s161
      %p168 = scmp.eq.s32.totalorder %s25, 1
      %p169 = por %p167, %p168
      %p170 = scmp.ne.s32.totalorder %s161, %s162
      %p171 = scmp.eq.s32.totalorder %s25, 0
      %p172 = por %p170, %p171
      %p173 = scmp.ne.s32.totalorder %s161, %s162
      %p174 = scmp.eq.s32.totalorder %s26, 1
      %p175 = por %p173, %p174
      %p177 = scmp.ne.s32.totalorder %s162, %s176
      %p178 = scmp.eq.s32.totalorder %s26, 0
      %p179 = por %p177, %p178
      %s180 = ssub.s32 %s20, %s27
      %p181 = scmp.eq.s32.totalorder %s180, 0
      %s183 = sadd.s32 %s182, 1
      %s184 = scalar_select %p181, %s182, %s183
      %p187 = pneg %p181
      %p188 = scmp.eq.s32.totalorder %s20, 1
      %p189 = por %p187, %p188
      %p190 = scmp.ne.s32.totalorder %s182, %s185
      %p191 = scmp.eq.s32.totalorder %s20, 0
      %p192 = por %p190, %p191
      %p193 = scmp.ne.s32.totalorder %s182, %s185
      %p194 = scmp.eq.s32.totalorder %s25, 1
      %p195 = por %p193, %p194
      %p196 = scmp.ne.s32.totalorder %s185, %s186
      %p197 = scmp.eq.s32.totalorder %s25, 0
      %p198 = por %p196, %p197
      %p199 = scmp.ne.s32.totalorder %s185, %s186
      %p200 = scmp.eq.s32.totalorder %s26, 1
      %p201 = por %p199, %p200
      %p203 = scmp.ne.s32.totalorder %s186, %s202
      %p204 = scmp.eq.s32.totalorder %s26, 0
      %p205 = por %p203, %p204
      %p206 = scmp.le.s32.totalorder 1, %s20
      %p207 = scmp.lt.s32.totalorder %s20, 3
      %p208 = pnand %p206, %p207
      %p209 = pneg %p208
      // Predicated region
      $region9: #{tpu_custom_call.1} parent=5 // pred_check
        _
      $region10: #{tpu_custom_call.1} parent=5 // pred_check_branch
        %211 = sbr.rel (%p208) target = $region12
      $region11: #{tpu_custom_call.1} parent=5 // pred_region
        %s212 = ssub.s32 %s20, 1
        // Predicated region
        $region13: #{tpu_custom_call.1} parent=11 // pred_check
          %p213 = pneg %p67
        $region14: #{tpu_custom_call.1} parent=11 // pred_check_branch
          %215 = sbr.rel (%p213) target = $region16
        $region15: #{tpu_custom_call.1} parent=11 // pred_region
          %s217 = ssub.s32 4096, 4096
          %218 = vsyncadd [#allocation6], %s217
          %s219 = sshll.u32 [#allocation5], 4
          %s220 = int_to_ptr.vmem [resolvable:$true] %s219
          %225 = dma.hbm_to_vmem [thread:$0]  %s1, 4096, %s220, [#allocation6], 128, 128, 8
        $region16: #{tpu_custom_call.1} parent=11 // pred_fallthru
          _
        // Predicated region
        $region17: #{tpu_custom_call.1} parent=11 // pred_check
          %p226 = pneg %p88
        $region18: #{tpu_custom_call.1} parent=11 // pred_check_branch
          %228 = sbr.rel (%p226) target = $region20
        $region19: #{tpu_custom_call.1} parent=11 // pred_region
          _
        $region20: #{tpu_custom_call.1} parent=11 // pred_fallthru
          _
        // Predicated region
        $region21: #{tpu_custom_call.1} parent=11 // pred_check
          %p229 = pneg %p109
        $region22: #{tpu_custom_call.1} parent=11 // pred_check_branch
          %231 = sbr.rel (%p229) target = $region24
        $region23: #{tpu_custom_call.1} parent=11 // pred_region
          _
        $region24: #{tpu_custom_call.1} parent=11 // pred_fallthru
          _
        // Predicated region
        $region25: #{tpu_custom_call.1} parent=11 // pred_check
          %p232 = pneg %p130
        $region26: #{tpu_custom_call.1} parent=11 // pred_check_branch
          %234 = sbr.rel (%p232) target = $region28
        $region27: #{tpu_custom_call.1} parent=11 // pred_region
          _
        $region28: #{tpu_custom_call.1} parent=11 // pred_fallthru
          _
        // Predicated region
        $region29: #{tpu_custom_call.1} parent=11 // pred_check
          %p235 = pneg %p151
        $region30: #{tpu_custom_call.1} parent=11 // pred_check_branch
          %237 = sbr.rel (%p235) target = $region32
        $region31: #{tpu_custom_call.1} parent=11 // pred_region
          _
        $region32: #{tpu_custom_call.1} parent=11 // pred_fallthru
          _
        // Predicated region
        $region33: #{tpu_custom_call.1} parent=11 // pred_check
          %p238 = pneg %p172
        $region34: #{tpu_custom_call.1} parent=11 // pred_check_branch
          %240 = sbr.rel (%p238) target = $region36
        $region35: #{tpu_custom_call.1} parent=11 // pred_region
          _
        $region36: #{tpu_custom_call.1} parent=11 // pred_fallthru
          _
      $region12: #{tpu_custom_call.1} parent=5 // pred_fallthru
        _
      %p241 = scmp.lt.s32.totalorder %s20, 2
      // Predicated region
      $region37: #{tpu_custom_call.1} parent=5 // pred_check
        %p242 = pneg %p241
      $region38: #{tpu_custom_call.1} parent=5 // pred_check_branch
        %244 = sbr.rel (%p242) target = $region40
      $region39: #{tpu_custom_call.1} parent=5 // pred_region
        // Predicated region
        $region41: #{tpu_custom_call.1} parent=39 // pred_check
          %p245 = pneg %p40
        $region42: #{tpu_custom_call.1} parent=39 // pred_check_branch
          %247 = sbr.rel (%p245) target = $region44
        $region43: #{tpu_custom_call.1} parent=39 // pred_region
          %s248 = sand.u32 %s30, 1
          %s249 = scalar_lea.sflag [#allocation3], %s248
          %s250 = sand.u32 %s30, 1
          %s251 = smul.addr %s250, 8
          %s252 = scalar_lea.vmem [#allocation2], %s251
          %s254 = ssub.s32 128, 128
          %255 = vsyncadd %s249, %s254
          %s256 = smul.addr %s20, 128
          %s257 = scalar_lea.hbm %s0, %s256
          %s259 = sshll.u32 %s252, 4
          %s260 = int_to_ptr.vmem [resolvable:$true] %s259
          %262 = dma.hbm_to_vmem [thread:$0]  %s257, 128, %s260, %s249
        $region44: #{tpu_custom_call.1} parent=39 // pred_fallthru
          _
      $region40: #{tpu_custom_call.1} parent=5 // pred_fallthru
        _
      %p263 = scmp.le.s32.totalorder 1, %s20
      %p264 = scmp.lt.s32.totalorder %s20, 3
      %p265 = pnand %p263, %p264
      %p266 = pneg %p265
      // Predicated region
      $region45: #{tpu_custom_call.1} parent=5 // pred_check
        _
      $region46: #{tpu_custom_call.1} parent=5 // pred_check_branch
        %268 = sbr.rel (%p265) target = $region48
      $region47: #{tpu_custom_call.1} parent=5 // pred_region
        %s269 = ssub.s32 %s20, 1
        %s270 = sand.u32 %s33, 1
        %s271 = scalar_lea.sflag [#allocation3], %s270
        %s272 = sand.u32 %s33, 1
        %s273 = smul.addr %s272, 8
        %s274 = scalar_lea.vmem [#allocation2], %s273
        // Predicated region
        $region49: #{tpu_custom_call.1} parent=47 // pred_check
          %p275 = pneg %p46
        $region50: #{tpu_custom_call.1} parent=47 // pred_check_branch
          %277 = sbr.rel (%p275) target = $region52
        $region51: #{tpu_custom_call.1} parent=47 // pred_region
          %278 = dma.done %s271, 128
        $region52: #{tpu_custom_call.1} parent=47 // pred_fallthru
          _
        // Predicated region
        $region53: #{tpu_custom_call.1} parent=47 // pred_check
          %p279 = pneg %p67
        $region54: #{tpu_custom_call.1} parent=47 // pred_check_branch
          %281 = sbr.rel (%p279) target = $region56
        $region55: #{tpu_custom_call.1} parent=47 // pred_region
          %282 = dma.done [#allocation6], 4096
        $region56: #{tpu_custom_call.1} parent=47 // pred_fallthru
          _
        %s283 = sand.u32 %s33, 1
        %s284 = scalar_lea.sflag [#allocation3], %s283
        %s285 = sand.u32 %s33, 1
        %s286 = smul.addr %s285, 8
        %s287 = scalar_lea.vmem [#allocation2], %s286
        %p288 = pneg %p46
        %p289 = pneg %p43
        %p290 = pneg %p67
        %p291 = pneg %p64
        %p292 = pneg %p88
        %p293 = pneg %p85
        %p294 = pneg %p109
        %p295 = pneg %p106
        %p296 = pneg %p130
        %p297 = pneg %p127
        %p298 = pneg %p151
        %p299 = pneg %p148
        %p300 = pneg %p172
        %p301 = pneg %p169
        %p302 = pneg %p198
        %p303 = pneg %p195
        %s304 = sand.u32 %s185, 1
        %s305 = scalar_lea.sflag [#allocation4], %s304
        %s306 = sand.u32 %s185, 1
        %s307 = smul.addr %s306, 8
        %s308 = scalar_lea.vmem [#allocation7], %s307
        %v309 = vld [vmem:[%s274] sm:$0xff]
        %v310 = vld [vmem:[#allocation5] sm:$0xff]
        %v311 = vld [vmem:[#allocation5 + $0x8] sm:$0xff]
        %v312 = vld [vmem:[#allocation5 + $0x10] sm:$0xff]
        %v313 = vld [vmem:[#allocation5 + $0x18] sm:$0xff]
        %v314 = vld [vmem:[#allocation5 + $0x20] sm:$0xff]
        %v315 = vld [vmem:[#allocation5 + $0x28] sm:$0xff]
        %v316 = vld [vmem:[#allocation5 + $0x30] sm:$0xff]
        %v317 = vld [vmem:[#allocation5 + $0x38] sm:$0xff]
        %v318 = vld [vmem:[#allocation5 + $0x40] sm:$0xff]
        %v319 = vld [vmem:[#allocation5 + $0x48] sm:$0xff]
        %v320 = vld [vmem:[#allocation5 + $0x50] sm:$0xff]
        %v321 = vld [vmem:[#allocation5 + $0x58] sm:$0xff]
        %v322 = vld [vmem:[#allocation5 + $0x60] sm:$0xff]
        %v323 = vld [vmem:[#allocation5 + $0x68] sm:$0xff]
        %v324 = vld [vmem:[#allocation5 + $0x70] sm:$0xff]
        %v325 = vld [vmem:[#allocation5 + $0x78] sm:$0xff]
        %v326 = vld [vmem:[%s2] sm:$0x1]
        %v328 = vlaneseq
        %v329 = vshrl.u32 %v328, 7
        %v330 = vsub.s32 0, %v329
        %v331 = vrot.slane %v326, %v330
        %333 = vmatprep.subr.mxu0 0.0
        %334 = vmatpush1.msra.mxu0 %v325
        %335 = vmatprep.subr.mxu0 0.0
        %336 = vmatpush1.msra.mxu0 %v324
        %337 = vmatprep.subr.mxu0 0.0
        %338 = vmatpush1.msra.mxu0 %v323
        %339 = vmatprep.subr.mxu0 0.0
        %340 = vmatpush1.msra.mxu0 %v322
        %341 = vmatprep.subr.mxu0 0.0
        %342 = vmatpush1.msra.mxu0 %v321
        %343 = vmatprep.subr.mxu0 0.0
        %344 = vmatpush1.msra.mxu0 %v320
        %345 = vmatprep.subr.mxu0 0.0
        %346 = vmatpush1.msra.mxu0 %v319
        %347 = vmatprep.subr.mxu0 0.0
        %348 = vmatpush1.msra.mxu0 %v318
        %349 = vmatprep.subr.mxu0 0.0
        %350 = vmatpush1.msra.mxu0 %v317
        %351 = vmatprep.subr.mxu0 0.0
        %352 = vmatpush1.msra.mxu0 %v316
        %353 = vmatprep.subr.mxu0 0.0
        %354 = vmatpush1.msra.mxu0 %v315
        %355 = vmatprep.subr.mxu0 0.0
        %356 = vmatpush1.msra.mxu0 %v314
        %357 = vmatprep.subr.mxu0 0.0
        %358 = vmatpush1.msra.mxu0 %v313
        %359 = vmatprep.subr.mxu0 0.0
        %360 = vmatpush1.msra.mxu0 %v312
        %361 = vmatprep.subr.mxu0 0.0
        %362 = vmatpush1.msra.mxu0 %v311
        %363 = vmatprep.subr.mxu0 0.0
        %364 = vmatpush1.msra.mxu0 %v310
        %365 = vmatprep.subr.mxu0 0.0
        %366 = vmatpush2.msra.mxu0 0.0
        %367 = vmatprep.subr.mxu0 0.0
        %368 = vmatpush2.msra.mxu0 0.0
        %369 = vmatprep.subr.mxu0 0.0
        %370 = vmatpush2.msra.mxu0 0.0
        %371 = vmatprep.subr.mxu0 0.0
        %372 = vmatpush2.msra.mxu0 0.0
        %373 = vmatprep.subr.mxu0 0.0
        %374 = vmatpush2.msra.mxu0 0.0
        %375 = vmatprep.subr.mxu0 0.0
        %376 = vmatpush2.msra.mxu0 0.0
        %377 = vmatprep.subr.mxu0 0.0
        %378 = vmatpush2.msra.mxu0 0.0
        %379 = vmatprep.subr.mxu0 0.0
        %380 = vmatpush2.msra.mxu0 0.0
        %381 = vmatprep.subr.mxu0 0.0
        %382 = vmatpush2.msra.mxu0 0.0
        %383 = vmatprep.subr.mxu0 0.0
        %384 = vmatpush2.msra.mxu0 0.0
        %385 = vmatprep.subr.mxu0 0.0
        %386 = vmatpush2.msra.mxu0 0.0
        %387 = vmatprep.subr.mxu0 0.0
        %388 = vmatpush2.msra.mxu0 0.0
        %389 = vmatprep.subr.mxu0 0.0
        %390 = vmatpush2.msra.mxu0 0.0
        %391 = vmatprep.subr.mxu0 0.0
        %392 = vmatpush2.msra.mxu0 0.0
        %393 = vmatprep.subr.mxu0 0.0
        %394 = vmatpush2.msra.mxu0 0.0
        %395 = vmatprep.subr.mxu0 0.0
        %396 = vmatpush2.msra.mxu0 0.0
        %397 = vmatprep.mubr.f32.mxu0 0.0
        %398 = vmatmul.mubr.f32.gmra.mxu0 %v309
        %v399 = vpop.f32.mrf.mxu0
        %v400 = vadd.f32 %v331, %v399
        %v401 = vpop.f32.mrf.mxu0
        %402 = vdwg.mxu0
        %v403 = vld [vmem:[%s3] sm:$0x1]
        %v404 = vld [vmem:[%s4] sm:$0x1]
        %405 = vadd.xlane.f32.xlu0 %v400
        %v406 = vpop.xlane.xlu0 %405
        %v407 = vmul.f32 %v406, 0.03125
        %v408 = vsub.f32 %v400, %v407
        %v409 = vmul.f32 %v400, %v400
        %410 = vadd.xlane.f32.xlu0 %v409
        %v411 = vpop.xlane.xlu0 %410
        %v412 = vmul.f32 %v411, 0.03125
        %v413 = vmul.f32 %v407, %v407
        %v414 = vsub.f32 %v412, %v413
        %v415 = vmax.f32 %v414, 0.0
        %v416 = vadd.f32 %v415, 1e-05
        %v417 = vrsqrt.pop %v416
        %v418 = vmul.f32 %v408, %v417
        %v420 = vlaneseq
        %v421 = vshrl.u32 %v420, 7
        %v422 = vsub.s32 0, %v421
        %v423 = vrot.slane %v403, %v422
        %v425 = vmul.f32 %v418, %v423
        %v427 = vlaneseq
        %v428 = vshrl.u32 %v427, 7
        %v429 = vsub.s32 0, %v428
        %v430 = vrot.slane %v404, %v429
        %v432 = vadd.f32 %v425, %v430
        %v433 = vtanh.pop %v432
        %s434 = scalar_lea.vmem [#allocation5], 128
        %v435 = vld [vmem:[%s434] sm:$0xff]
        %v436 = vld [vmem:[%s434 + $0x8] sm:$0xff]
        %v437 = vld [vmem:[%s434 + $0x10] sm:$0xff]
        %v438 = vld [vmem:[%s434 + $0x18] sm:$0xff]
        %v439 = vld [vmem:[%s434 + $0x20] sm:$0xff]
        %v440 = vld [vmem:[%s434 + $0x28] sm:$0xff]
        %v441 = vld [vmem:[%s434 + $0x30] sm:$0xff]
        %v442 = vld [vmem:[%s434 + $0x38] sm:$0xff]
        %v443 = vld [vmem:[%s434 + $0x40] sm:$0xff]
        %v444 = vld [vmem:[%s434 + $0x48] sm:$0xff]
        %v445 = vld [vmem:[%s434 + $0x50] sm:$0xff]
        %v446 = vld [vmem:[%s434 + $0x58] sm:$0xff]
        %v447 = vld [vmem:[%s434 + $0x60] sm:$0xff]
        %v448 = vld [vmem:[%s434 + $0x68] sm:$0xff]
        %v449 = vld [vmem:[%s434 + $0x70] sm:$0xff]
        %v450 = vld [vmem:[%s434 + $0x78] sm:$0xff]
        %s451 = scalar_lea.vmem %s2, 1
        %v452 = vld [vmem:[%s451] sm:$0x1]
        %v454 = vlaneseq
        %v455 = vshrl.u32 %v454, 7
        %v456 = vsub.s32 0, %v455
        %v457 = vrot.slane %v452, %v456
        %459 = vmatprep.subr.mxu0 0.0
        %460 = vmatpush1.msra.mxu0 %v450
        %461 = vmatprep.subr.mxu0 0.0
        %462 = vmatpush1.msra.mxu0 %v449
        %463 = vmatprep.subr.mxu0 0.0
        %464 = vmatpush1.msra.mxu0 %v448
        %465 = vmatprep.subr.mxu0 0.0
        %466 = vmatpush1.msra.mxu0 %v447
        %467 = vmatprep.subr.mxu0 0.0
        %468 = vmatpush1.msra.mxu0 %v446
        %469 = vmatprep.subr.mxu0 0.0
        %470 = vmatpush1.msra.mxu0 %v445
        %471 = vmatprep.subr.mxu0 0.0
        %472 = vmatpush1.msra.mxu0 %v444
        %473 = vmatprep.subr.mxu0 0.0
        %474 = vmatpush1.msra.mxu0 %v443
        %475 = vmatprep.subr.mxu0 0.0
        %476 = vmatpush1.msra.mxu0 %v442
        %477 = vmatprep.subr.mxu0 0.0
        %478 = vmatpush1.msra.mxu0 %v441
        %479 = vmatprep.subr.mxu0 0.0
        %480 = vmatpush1.msra.mxu0 %v440
        %481 = vmatprep.subr.mxu0 0.0
        %482 = vmatpush1.msra.mxu0 %v439
        %483 = vmatprep.subr.mxu0 0.0
        %484 = vmatpush1.msra.mxu0 %v438
        %485 = vmatprep.subr.mxu0 0.0
        %486 = vmatpush1.msra.mxu0 %v437
        %487 = vmatprep.subr.mxu0 0.0
        %488 = vmatpush1.msra.mxu0 %v436
        %489 = vmatprep.subr.mxu0 0.0
        %490 = vmatpush1.msra.mxu0 %v435
        %491 = vmatprep.subr.mxu0 0.0
        %492 = vmatpush2.msra.mxu0 0.0
        %493 = vmatprep.subr.mxu0 0.0
        %494 = vmatpush2.msra.mxu0 0.0
        %495 = vmatprep.subr.mxu0 0.0
        %496 = vmatpush2.msra.mxu0 0.0
        %497 = vmatprep.subr.mxu0 0.0
        %498 = vmatpush2.msra.mxu0 0.0
        %499 = vmatprep.subr.mxu0 0.0
        %500 = vmatpush2.msra.mxu0 0.0
        %501 = vmatprep.subr.mxu0 0.0
        %502 = vmatpush2.msra.mxu0 0.0
        %503 = vmatprep.subr.mxu0 0.0
        %504 = vmatpush2.msra.mxu0 0.0
        %505 = vmatprep.subr.mxu0 0.0
        %506 = vmatpush2.msra.mxu0 0.0
        %507 = vmatprep.subr.mxu0 0.0
        %508 = vmatpush2.msra.mxu0 0.0
        %509 = vmatprep.subr.mxu0 0.0
        %510 = vmatpush2.msra.mxu0 0.0
        %511 = vmatprep.subr.mxu0 0.0
        %512 = vmatpush2.msra.mxu0 0.0
        %513 = vmatprep.subr.mxu0 0.0
        %514 = vmatpush2.msra.mxu0 0.0
        %515 = vmatprep.subr.mxu0 0.0
        %516 = vmatpush2.msra.mxu0 0.0
        %517 = vmatprep.subr.mxu0 0.0
        %518 = vmatpush2.msra.mxu0 0.0
        %519 = vmatprep.subr.mxu0 0.0
        %520 = vmatpush2.msra.mxu0 0.0
        %521 = vmatprep.subr.mxu0 0.0
        %522 = vmatpush2.msra.mxu0 0.0
        %523 = vmatprep.mubr.f32.mxu0 0.0
        %524 = vmatmul.mubr.f32.gmra.mxu0 %v433
        %v525 = vpop.f32.mrf.mxu0
        %v526 = vadd.f32 %v457, %v525
        %v527 = vpop.f32.mrf.mxu0
        %528 = vdwg.mxu0
        %s529 = scalar_lea.vmem %s3, 1
        %v530 = vld [vmem:[%s529] sm:$0x1]
        %s531 = scalar_lea.vmem %s4, 1
        %v532 = vld [vmem:[%s531] sm:$0x1]
        %533 = vadd.xlane.f32.xlu0 %v526
        %v534 = vpop.xlane.xlu0 %533
        %v535 = vmul.f32 %v534, 0.03125
        %v536 = vsub.f32 %v526, %v535
        %v537 = vmul.f32 %v526, %v526
        %538 = vadd.xlane.f32.xlu0 %v537
        %v539 = vpop.xlane.xlu0 %538
        %v540 = vmul.f32 %v539, 0.03125
        %v541 = vmul.f32 %v535, %v535
        %v542 = vsub.f32 %v540, %v541
        %v543 = vmax.f32 %v542, 0.0
        %v544 = vadd.f32 %v543, 1e-05
        %v545 = vrsqrt.pop %v544
        %v546 = vmul.f32 %v536, %v545
        %v548 = vlaneseq
        %v549 = vshrl.u32 %v548, 7
        %v550 = vsub.s32 0, %v549
        %v551 = vrot.slane %v530, %v550
        %v553 = vmul.f32 %v546, %v551
        %v555 = vlaneseq
        %v556 = vshrl.u32 %v555, 7
        %v557 = vsub.s32 0, %v556
        %v558 = vrot.slane %v532, %v557
        %v560 = vadd.f32 %v553, %v558
        %v561 = vtanh.pop %v560
        %v562 = vadd.f32 %v309, %v561
        %v563 = vld [vmem:[%s5] sm:$0x1]
        %v564 = vld [vmem:[%s6] sm:$0x1]
        %565 = vadd.xlane.f32.xlu0 %v562
        %v566 = vpop.xlane.xlu0 %565
        %v567 = vmul.f32 %v566, 0.03125
        %v568 = vsub.f32 %v562, %v567
        %v569 = vmul.f32 %v562, %v562
        %570 = vadd.xlane.f32.xlu0 %v569
        %v571 = vpop.xlane.xlu0 %570
        %v572 = vmul.f32 %v571, 0.03125
        %v573 = vmul.f32 %v567, %v567
        %v574 = vsub.f32 %v572, %v573
        %v575 = vmax.f32 %v574, 0.0
        %v576 = vadd.f32 %v575, 1e-05
        %v577 = vrsqrt.pop %v576
        %v578 = vmul.f32 %v568, %v577
        %v580 = vlaneseq
        %v581 = vshrl.u32 %v580, 7
        %v582 = vsub.s32 0, %v581
        %v583 = vrot.slane %v563, %v582
        %v585 = vmul.f32 %v578, %v583
        %v587 = vlaneseq
        %v588 = vshrl.u32 %v587, 7
        %v589 = vsub.s32 0, %v588
        %v590 = vrot.slane %v564, %v589
        %v592 = vadd.f32 %v585, %v590
        %v593 = vtanh.pop %v592
        %594 = vst [vmem:[%s308] sm:$0xff] %v593
        %s595 = sand.u32 %s185, 1
        %s596 = scalar_lea.sflag [#allocation4], %s595
        %s597 = sand.u32 %s185, 1
        %s598 = smul.addr %s597, 8
        %s599 = scalar_lea.vmem [#allocation7], %s598
        // Predicated region
        $region57: #{tpu_custom_call.1} parent=47 // pred_check
          %p600 = pneg %p195
        $region58: #{tpu_custom_call.1} parent=47 // pred_check_branch
          %602 = sbr.rel (%p600) target = $region60
        $region59: #{tpu_custom_call.1} parent=47 // pred_region
          %s604 = ssub.s32 128, 128
          %605 = vsyncadd %s596, %s604
          %s606 = smul.addr %s25, 128
          %s607 = scalar_lea.hbm %s7, %s606
          %s609 = sshll.u32 %s599, 4
          %s610 = int_to_ptr.vmem [resolvable:$true] %s609
          %612 = dma.vmem_to_hbm [thread:$0]  %s610, 128, %s607, %s596
        $region60: #{tpu_custom_call.1} parent=47 // pred_fallthru
          _
      $region48: #{tpu_custom_call.1} parent=5 // pred_fallthru
        _
      %p613 = scmp.le.s32.totalorder 2, %s20
      // Predicated region
      $region61: #{tpu_custom_call.1} parent=5 // pred_check
        %p614 = pneg %p613
      $region62: #{tpu_custom_call.1} parent=5 // pred_check_branch
        %616 = sbr.rel (%p614) target = $region64
      $region63: #{tpu_custom_call.1} parent=5 // pred_region
        %s617 = ssub.s32 %s20, 2
        // Predicated region
        $region65: #{tpu_custom_call.1} parent=63 // pred_check
          %p618 = pneg %p201
        $region66: #{tpu_custom_call.1} parent=63 // pred_check_branch
          %620 = sbr.rel (%p618) target = $region68
        $region67: #{tpu_custom_call.1} parent=63 // pred_region
          %s621 = sand.u32 %s186, 1
          %s622 = scalar_lea.sflag [#allocation4], %s621
          %s623 = sand.u32 %s186, 1
          %s624 = smul.addr %s623, 8
          %s625 = scalar_lea.vmem [#allocation7], %s624
          %626 = dma.done %s622, 128
        $region68: #{tpu_custom_call.1} parent=63 // pred_fallthru
          _
      $region64: #{tpu_custom_call.1} parent=5 // pred_fallthru
        _
    $region6: #{tpu_custom_call.1} parent=1 // loop_footer
      %s24 = sadd.s32 1, %s20
    $region7: #{tpu_custom_call.1} parent=1 // loop_footer_branch
      %19 = sbr.rel target = $region3
    $region8: #{tpu_custom_call.1} parent=1 // loop_exit
      _
    %627 = vsyncpa [#allocation3], 1
    %s628 = scalar_lea.sflag [#allocation3], 1
    %629 = vsyncpa %s628, 1
    %630 = vsyncpa [#allocation6], 1
    %631 = vsyncpa [#allocation4], 1
    %s632 = scalar_lea.sflag [#allocation4], 1
    %633 = vsyncpa %s632, 1

</llo_original>
